<compile_context>
chip_gen: v7x
topology: tpu7x:2x2x1
jax: 0.10.0
libtpu: 0.0.40
codegen_flags: <defaults>
</compile_context>

<pallas_src>
import functools

import jax
import jax.numpy as jnp
from jax.experimental import pallas as pl
from jax.experimental.pallas import tpu as pltpu


def _decoder_kernel(x_ref, w_in_ref, w_mid_ref, b_mid_ref, w_out_ref, b_out_ref,
                    o_ref, *, layers):
    # linear_in (no bias) + ReLU : (tile_n, inc) @ (inc, dim) -> (tile_n, dim)
    h = jnp.dot(x_ref[...], w_in_ref[...], preferred_element_type=jnp.float32)
    h = jnp.maximum(h, 0.0)

    # hidden Linear(dim, dim) + ReLU layers, statically unrolled
    for i in range(layers):
        h = jnp.dot(h, w_mid_ref[i], preferred_element_type=jnp.float32)
        h = jnp.maximum(h + b_mid_ref[i], 0.0)

    # linear_out (no activation)
    out = jnp.dot(h, w_out_ref[...], preferred_element_type=jnp.float32)
    out = out + b_out_ref[...]
    o_ref[...] = out.astype(o_ref.dtype)


def decoder_forward(x, w_in, w_mid, b_mid, w_out, b_out, *, tile_n=128):
    """Fused Decoder forward.

    x:     (N, inc)            native dtype (f32 / bf16)
    w_in:  (inc, dim)          linear_in weight, stored as (in, out)
    w_mid: (layers, dim, dim)  hidden weights, stored as (in, out)
    b_mid: (layers, 1, dim)    hidden biases
    w_out: (dim, outc)
    b_out: (1, outc)
    """
    n, inc = x.shape
    dim = w_in.shape[1]
    layers = int(w_mid.shape[0])
    outc = w_out.shape[1]

    # batch tile: multiple of 8 sublanes (single block for tiny batches)
    tile_n = min(tile_n, n)
    if tile_n % 8 != 0:
        tile_n = n
    n_pad = pl.cdiv(n, tile_n) * tile_n
    x_p = x if n_pad == n else jnp.pad(x, ((0, n_pad - n), (0, 0)))

    kernel = functools.partial(_decoder_kernel, layers=layers)

    out = pl.pallas_call(
        kernel,
        out_shape=jax.ShapeDtypeStruct((n_pad, outc), x.dtype),
        grid_spec=pltpu.PrefetchScalarGridSpec(
            num_scalar_prefetch=0,
            grid=(n_pad // tile_n,),
            in_specs=[
                pl.BlockSpec((tile_n, inc), lambda i: (i, 0)),        # x tile
                pl.BlockSpec((inc, dim), lambda i: (0, 0)),           # w_in (resident)
                pl.BlockSpec((layers, dim, dim), lambda i: (0, 0, 0)),  # hidden W
                pl.BlockSpec((layers, 1, dim), lambda i: (0, 0, 0)),    # hidden b
                pl.BlockSpec((dim, outc), lambda i: (0, 0)),          # w_out
                pl.BlockSpec((1, outc), lambda i: (0, 0)),            # b_out
            ],
            out_specs=pl.BlockSpec((tile_n, outc), lambda i: (i, 0)),
        ),
        compiler_params=pltpu.CompilerParams(
            dimension_semantics=("parallel",),   # independent batch tiles -> megacore on v7x
        ),
    )(x_p, w_in, w_mid, b_mid, w_out, b_out)
    return out[:n]


def _decoder_ref(x, w_in, w_mid, b_mid, w_out, b_out):
    """Pure-JAX reference matching the PyTorch Decoder.forward."""
    h = jax.nn.relu(x.astype(jnp.float32) @ w_in.astype(jnp.float32))
    for i in range(w_mid.shape[0]):
        h = jax.nn.relu(h @ w_mid[i].astype(jnp.float32) + b_mid[i].astype(jnp.float32))
    out = h @ w_out.astype(jnp.float32) + b_out.astype(jnp.float32)
    return out.astype(x.dtype)


if __name__ == "__main__":
    key = jax.random.PRNGKey(0)
    ks = jax.random.split(key, 6)

    # small shapes consistent with Decoder(inc, dimension, outc, head, layers):
    # batch=16, inc=32, dimension=64, outc=8, layers=2 (head only feeds the unused attention)
    N, INC, DIM, OUTC, LAYERS = 16, 32, 64, 8, 2

    x = jax.random.normal(ks[0], (N, INC), dtype=jnp.float32)
    w_in = jax.random.normal(ks[1], (INC, DIM), dtype=jnp.float32) * 0.1
    w_mid = jax.random.normal(ks[2], (LAYERS, DIM, DIM), dtype=jnp.float32) * 0.1
    b_mid = jax.random.normal(ks[3], (LAYERS, 1, DIM), dtype=jnp.float32) * 0.1
    w_out = jax.random.normal(ks[4], (DIM, OUTC), dtype=jnp.float32) * 0.1
    b_out = jax.random.normal(ks[5], (1, OUTC), dtype=jnp.float32) * 0.1

    out = decoder_forward(x, w_in, w_mid, b_mid, w_out, b_out, tile_n=8)
    jax.block_until_ready(out)

    ref = _decoder_ref(x, w_in, w_mid, b_mid, w_out, b_out)
    assert out.shape == (N, OUTC)
    assert jnp.allclose(out, ref, atol=1e-4, rtol=1e-4), (out, ref)
    print("KERNEL_OK")
</pallas_src>

<mosaic_0001>
module attributes {stable_mosaic.version = 11 : i64} {
  func.func @_decoder_kernel(%arg0: i32, %arg1: memref<8x32xf32, #tpu.memory_space<vmem>>, %arg2: memref<32x64xf32, #tpu.memory_space<vmem>>, %arg3: memref<2x64x64xf32, #tpu.memory_space<vmem>>, %arg4: memref<2x1x64xf32, #tpu.memory_space<vmem>>, %arg5: memref<64x8xf32, #tpu.memory_space<vmem>>, %arg6: memref<1x8xf32, #tpu.memory_space<vmem>>, %arg7: memref<8x8xf32, #tpu.memory_space<vmem>>) attributes {dimension_semantics = [#tpu.dimension_semantics<parallel>], iteration_bounds = array<i64: 2>, scalar_prefetch = 0 : i64, scratch_operands = 0 : i64, tpu.core_type = #tpu.core_type<tc>, window_params = [{transform_indices = @transform_0, window_bounds = array<i64: 8, 32>}, {pipeline_mode = #tpu.pipeline_mode<synchronous>, transform_indices = @transform_1, window_bounds = array<i64: 32, 64>}, {pipeline_mode = #tpu.pipeline_mode<synchronous>, transform_indices = @transform_2, window_bounds = array<i64: 2, 64, 64>}, {pipeline_mode = #tpu.pipeline_mode<synchronous>, transform_indices = @transform_3, window_bounds = array<i64: 2, 1, 64>}, {pipeline_mode = #tpu.pipeline_mode<synchronous>, transform_indices = @transform_4, window_bounds = array<i64: 64, 8>}, {pipeline_mode = #tpu.pipeline_mode<synchronous>, transform_indices = @transform_5, window_bounds = array<i64: 1, 8>}, {transform_indices = @transform_6, window_bounds = array<i64: 8, 8>}]} {
    %c0 = arith.constant 0 : index
    %c0_0 = arith.constant 0 : index
    %0 = vector.load %arg1[%c0, %c0_0] : memref<8x32xf32, #tpu.memory_space<vmem>>, vector<8x32xf32>
    %c0_1 = arith.constant 0 : index
    %c0_2 = arith.constant 0 : index
    %1 = vector.load %arg2[%c0_1, %c0_2] : memref<32x64xf32, #tpu.memory_space<vmem>>, vector<32x64xf32>
    %cst = arith.constant dense<0.000000e+00> : vector<8x64xf32>
    %2 = tpu.matmul %0, %1, %cst {dimension_numbers = #tpu.dot_dimension_numbers<[1], [0], [0], [1], [0, 0, 1, 1], [], []>} : vector<8x32xf32>, vector<32x64xf32>, vector<8x64xf32> -> vector<8x64xf32>
    %cst_3 = arith.constant 0.000000e+00 : f32
    %3 = vector.broadcast %cst_3 : f32 to vector<8x64xf32>
    %4 = arith.maximumf %2, %3 : vector<8x64xf32>
    %c0_4 = arith.constant 0 : index
    %c0_5 = arith.constant 0 : index
    %c0_6 = arith.constant 0 : index
    %5 = vector.load %arg3[%c0_4, %c0_5, %c0_6] : memref<2x64x64xf32, #tpu.memory_space<vmem>>, vector<1x64x64xf32>
    %6 = vector.shape_cast %5 : vector<1x64x64xf32> to vector<64x64xf32>
    %cst_7 = arith.constant dense<0.000000e+00> : vector<8x64xf32>
    %7 = tpu.matmul %4, %6, %cst_7 {dimension_numbers = #tpu.dot_dimension_numbers<[1], [0], [0], [1], [0, 0, 1, 1], [], []>} : vector<8x64xf32>, vector<64x64xf32>, vector<8x64xf32> -> vector<8x64xf32>
    %c0_8 = arith.constant 0 : index
    %c0_9 = arith.constant 0 : index
    %c0_10 = arith.constant 0 : index
    %8 = vector.load %arg4[%c0_8, %c0_9, %c0_10] : memref<2x1x64xf32, #tpu.memory_space<vmem>>, vector<1x1x64xf32>
    %9 = vector.shape_cast %8 : vector<1x1x64xf32> to vector<1x64xf32>
    %10 = vector.broadcast %9 : vector<1x64xf32> to vector<8x64xf32>
    %11 = arith.addf %7, %10 : vector<8x64xf32>
    %cst_11 = arith.constant 0.000000e+00 : f32
    %12 = vector.broadcast %cst_11 : f32 to vector<8x64xf32>
    %13 = arith.maximumf %11, %12 : vector<8x64xf32>
    %c1 = arith.constant 1 : index
    %c0_12 = arith.constant 0 : index
    %c0_13 = arith.constant 0 : index
    %14 = vector.load %arg3[%c1, %c0_12, %c0_13] : memref<2x64x64xf32, #tpu.memory_space<vmem>>, vector<1x64x64xf32>
    %15 = vector.shape_cast %14 : vector<1x64x64xf32> to vector<64x64xf32>
    %cst_14 = arith.constant dense<0.000000e+00> : vector<8x64xf32>
    %16 = tpu.matmul %13, %15, %cst_14 {dimension_numbers = #tpu.dot_dimension_numbers<[1], [0], [0], [1], [0, 0, 1, 1], [], []>} : vector<8x64xf32>, vector<64x64xf32>, vector<8x64xf32> -> vector<8x64xf32>
    %c1_15 = arith.constant 1 : index
    %c0_16 = arith.constant 0 : index
    %c0_17 = arith.constant 0 : index
    %17 = vector.load %arg4[%c1_15, %c0_16, %c0_17] : memref<2x1x64xf32, #tpu.memory_space<vmem>>, vector<1x1x64xf32>
    %18 = vector.shape_cast %17 : vector<1x1x64xf32> to vector<1x64xf32>
    %19 = vector.broadcast %18 : vector<1x64xf32> to vector<8x64xf32>
    %20 = arith.addf %16, %19 : vector<8x64xf32>
    %cst_18 = arith.constant 0.000000e+00 : f32
    %21 = vector.broadcast %cst_18 : f32 to vector<8x64xf32>
    %22 = arith.maximumf %20, %21 : vector<8x64xf32>
    %c0_19 = arith.constant 0 : index
    %c0_20 = arith.constant 0 : index
    %23 = vector.load %arg5[%c0_19, %c0_20] : memref<64x8xf32, #tpu.memory_space<vmem>>, vector<64x8xf32>
    %cst_21 = arith.constant dense<0.000000e+00> : vector<8x8xf32>
    %24 = tpu.matmul %22, %23, %cst_21 {dimension_numbers = #tpu.dot_dimension_numbers<[1], [0], [0], [1], [0, 0, 1, 1], [], []>} : vector<8x64xf32>, vector<64x8xf32>, vector<8x8xf32> -> vector<8x8xf32>
    %c0_22 = arith.constant 0 : index
    %c0_23 = arith.constant 0 : index
    %25 = vector.load %arg6[%c0_22, %c0_23] : memref<1x8xf32, #tpu.memory_space<vmem>>, vector<1x8xf32>
    %26 = vector.broadcast %25 : vector<1x8xf32> to vector<8x8xf32>
    %27 = arith.addf %24, %26 : vector<8x8xf32>
    %c0_24 = arith.constant 0 : index
    %c0_25 = arith.constant 0 : index
    %28 = vector.load %arg7[%c0_24, %c0_25] : memref<8x8xf32, #tpu.memory_space<vmem>>, vector<8x8xf32>
    tpu.vector_store %arg7[%c0_24, %c0_25], %27 {strides = array<i32>} : memref<8x8xf32, #tpu.memory_space<vmem>>, vector<8x8xf32>,
    return
  }
  func.func @transform_0(%arg0: i32) -> (i32, i32) {
    %c0_i32 = arith.constant 0 : i32
    %c0_i32_0 = arith.constant 0 : i32
    return %arg0, %c0_i32 : i32, i32
  }
  func.func @transform_1(%arg0: i32) -> (i32, i32) {
    %c0_i32 = arith.constant 0 : i32
    %c0_i32_0 = arith.constant 0 : i32
    %c0_i32_1 = arith.constant 0 : i32
    return %c0_i32, %c0_i32_0 : i32, i32
  }
  func.func @transform_2(%arg0: i32) -> (i32, i32, i32) {
    %c0_i32 = arith.constant 0 : i32
    %c0_i32_0 = arith.constant 0 : i32
    %c0_i32_1 = arith.constant 0 : i32
    %c0_i32_2 = arith.constant 0 : i32
    return %c0_i32, %c0_i32_0, %c0_i32_1 : i32, i32, i32
  }
  func.func @transform_3(%arg0: i32) -> (i32, i32, i32) {
    %c0_i32 = arith.constant 0 : i32
    %c0_i32_0 = arith.constant 0 : i32
    %c0_i32_1 = arith.constant 0 : i32
    %c0_i32_2 = arith.constant 0 : i32
    return %c0_i32, %c0_i32_0, %c0_i32_1 : i32, i32, i32
  }
  func.func @transform_4(%arg0: i32) -> (i32, i32) {
    %c0_i32 = arith.constant 0 : i32
    %c0_i32_0 = arith.constant 0 : i32
    %c0_i32_1 = arith.constant 0 : i32
    return %c0_i32, %c0_i32_0 : i32, i32
  }
  func.func @transform_5(%arg0: i32) -> (i32, i32) {
    %c0_i32 = arith.constant 0 : i32
    %c0_i32_0 = arith.constant 0 : i32
    %c0_i32_1 = arith.constant 0 : i32
    return %c0_i32, %c0_i32_0 : i32, i32
  }
  func.func @transform_6(%arg0: i32) -> (i32, i32) {
    %c0_i32 = arith.constant 0 : i32
    %c0_i32_0 = arith.constant 0 : i32
    return %arg0, %c0_i32 : i32, i32
  }
}

</mosaic_0001>

<llo_original>
// kernel: tpu_custom_call.1
$region0: #{tpu_custom_call.1}
  #allocation0 [shape = 'u32[]', space=smem, size = 0x4, offset = 0x4, fixed_abs, tag = 'smem constant byte address 0x4 - core index']
  #allocation1 [shape = 'u32[144,128]{1,0:T(1,128)}', space=vmem, size = 0x12000, scoped, tag = 'internal scratch']
  %s0 = inlined_call_operand.vmem [shape: f32[16,32], index: 0, kind: input, shape index: {}]
  %s1 = inlined_call_operand.vmem [shape: f32[32,64], index: 1, kind: input, shape index: {}]
  %s2 = inlined_call_operand.hbm [shape: f32[2,64,64], index: 2, kind: input, shape index: {}]
  %s3 = inlined_call_operand.vmem [shape: f32[2,1,64], index: 3, kind: input, shape index: {}]
  %s4 = inlined_call_operand.vmem [shape: f32[64,8], index: 4, kind: input, shape index: {}]
  %s5 = inlined_call_operand.vmem [shape: f32[1,8], index: 5, kind: input, shape index: {}]
  %s6 = inlined_call_operand.vmem [shape: f32[16,8], index: 6, kind: output, shape index: {}]
  %s7 = sld [smem:[#allocation0]]
  $region61: #{tpu_custom_call.1} parent=0
    _
  %s9 = ssub.s32 1, %s7
  %s10 = scalar_select 0, %s9, %s7
  $region1: #{tpu_custom_call.1} parent=0
    #allocation2 [shape = 'u8[65536]{0}', space=vmem, size = 0x10000, scoped, tag = 'input window, operand 2, single buffered']
    #allocation3 [shape = 's32[2]{0}', space=sflag, size = 0x8, scoped, tag = 'scoped memory for tpu_custom_call.1']
    %11 = vsyncpa [#allocation3], 0
    loop: start=0, step=1, limit=4
    $region2: #{tpu_custom_call.1} parent=1 // loop_pre_header
      _
    $region3: #{tpu_custom_call.1} parent=1 // loop_header
      %s13 = sphi 0, %s17
      %p14 = scmp.ge.s32.totalorder %s13, 4
      %s23 = sphi 0, %s25
      %s26 = sphi 0, %s23
      %s27 = sphi 0, %s26
      %s43 = sphi 0, %s27
      %s47 = sphi 0, %s47
      %s49 = sphi 0, %s47
      %s50 = sphi 0, %s49
      %s64 = sphi 0, %s50
      %s68 = sphi 0, %s68
      %s70 = sphi 0, %s68
      %s71 = sphi 0, %s70
      %s85 = sphi 0, %s71
      %s89 = sphi 0, %s89
      %s91 = sphi 0, %s89
      %s92 = sphi 0, %s91
      %s106 = sphi 0, %s92
      %s110 = sphi 0, %s110
      %s112 = sphi 0, %s110
      %s113 = sphi 0, %s112
      %s127 = sphi 0, %s113
      %s131 = sphi 0, %s131
      %s133 = sphi 0, %s131
      %s134 = sphi 0, %s133
      %s148 = sphi 0, %s134
      %s154 = sphi 0, %s156
      %s157 = sphi 0, %s154
      %s158 = sphi 0, %s157
      %s174 = sphi 0, %s158
    $region4: #{tpu_custom_call.1} parent=1 // loop_header_branch
      %16 = sbr.rel (%p14) target = $region8
    $region5: #{tpu_custom_call.1} parent=1 // loop_body
      %s18 = ssub.s32 %s13, 1
      %s19 = ssub.s32 %s13, 2
      %s20 = sadd.s32 %s13, 1
      %s21 = ssub.s32 %s13, %s20
      %p22 = scmp.eq.s32.totalorder %s21, 0
      %s24 = sadd.s32 %s23, 1
      %s25 = scalar_select %p22, %s23, %s24
      %p28 = pneg %p22
      %p29 = scmp.eq.s32.totalorder %s13, 1
      %p30 = por %p28, %p29
      %p31 = scmp.ne.s32.totalorder %s23, %s26
      %p32 = scmp.eq.s32.totalorder %s13, 0
      %p33 = por %p31, %p32
      %p34 = scmp.ne.s32.totalorder %s23, %s26
      %p35 = scmp.eq.s32.totalorder %s18, 1
      %p36 = por %p34, %p35
      %p37 = scmp.ne.s32.totalorder %s26, %s27
      %p38 = scmp.eq.s32.totalorder %s18, 0
      %p39 = por %p37, %p38
      %p40 = scmp.ne.s32.totalorder %s26, %s27
      %p41 = scmp.eq.s32.totalorder %s19, 1
      %p42 = por %p40, %p41
      %p44 = scmp.ne.s32.totalorder %s27, %s43
      %p45 = scmp.eq.s32.totalorder %s19, 0
      %p46 = por %p44, %p45
      %s48 = sadd.s32 %s47, 1
      %p51 = scmp.eq.s32.totalorder %s13, 1
      %p52 = scmp.ne.s32.totalorder %s47, %s49
      %p53 = scmp.eq.s32.totalorder %s13, 0
      %p54 = por %p52, %p53
      %p55 = scmp.ne.s32.totalorder %s47, %s49
      %p56 = scmp.eq.s32.totalorder %s18, 1
      %p57 = por %p55, %p56
      %p58 = scmp.ne.s32.totalorder %s49, %s50
      %p59 = scmp.eq.s32.totalorder %s18, 0
      %p60 = por %p58, %p59
      %p61 = scmp.ne.s32.totalorder %s49, %s50
      %p62 = scmp.eq.s32.totalorder %s19, 1
      %p63 = por %p61, %p62
      %p65 = scmp.ne.s32.totalorder %s50, %s64
      %p66 = scmp.eq.s32.totalorder %s19, 0
      %p67 = por %p65, %p66
      %s69 = sadd.s32 %s68, 1
      %p72 = scmp.eq.s32.totalorder %s13, 1
      %p73 = scmp.ne.s32.totalorder %s68, %s70
      %p74 = scmp.eq.s32.totalorder %s13, 0
      %p75 = por %p73, %p74
      %p76 = scmp.ne.s32.totalorder %s68, %s70
      %p77 = scmp.eq.s32.totalorder %s18, 1
      %p78 = por %p76, %p77
      %p79 = scmp.ne.s32.totalorder %s70, %s71
      %p80 = scmp.eq.s32.totalorder %s18, 0
      %p81 = por %p79, %p80
      %p82 = scmp.ne.s32.totalorder %s70, %s71
      %p83 = scmp.eq.s32.totalorder %s19, 1
      %p84 = por %p82, %p83
      %p86 = scmp.ne.s32.totalorder %s71, %s85
      %p87 = scmp.eq.s32.totalorder %s19, 0
      %p88 = por %p86, %p87
      %s90 = sadd.s32 %s89, 1
      %p93 = scmp.eq.s32.totalorder %s13, 1
      %p94 = scmp.ne.s32.totalorder %s89, %s91
      %p95 = scmp.eq.s32.totalorder %s13, 0
      %p96 = por %p94, %p95
      %p97 = scmp.ne.s32.totalorder %s89, %s91
      %p98 = scmp.eq.s32.totalorder %s18, 1
      %p99 = por %p97, %p98
      %p100 = scmp.ne.s32.totalorder %s91, %s92
      %p101 = scmp.eq.s32.totalorder %s18, 0
      %p102 = por %p100, %p101
      %p103 = scmp.ne.s32.totalorder %s91, %s92
      %p104 = scmp.eq.s32.totalorder %s19, 1
      %p105 = por %p103, %p104
      %p107 = scmp.ne.s32.totalorder %s92, %s106
      %p108 = scmp.eq.s32.totalorder %s19, 0
      %p109 = por %p107, %p108
      %s111 = sadd.s32 %s110, 1
      %p114 = scmp.eq.s32.totalorder %s13, 1
      %p115 = scmp.ne.s32.totalorder %s110, %s112
      %p116 = scmp.eq.s32.totalorder %s13, 0
      %p117 = por %p115, %p116
      %p118 = scmp.ne.s32.totalorder %s110, %s112
      %p119 = scmp.eq.s32.totalorder %s18, 1
      %p120 = por %p118, %p119
      %p121 = scmp.ne.s32.totalorder %s112, %s113
      %p122 = scmp.eq.s32.totalorder %s18, 0
      %p123 = por %p121, %p122
      %p124 = scmp.ne.s32.totalorder %s112, %s113
      %p125 = scmp.eq.s32.totalorder %s19, 1
      %p126 = por %p124, %p125
      %p128 = scmp.ne.s32.totalorder %s113, %s127
      %p129 = scmp.eq.s32.totalorder %s19, 0
      %p130 = por %p128, %p129
      %s132 = sadd.s32 %s131, 1
      %p135 = scmp.eq.s32.totalorder %s13, 1
      %p136 = scmp.ne.s32.totalorder %s131, %s133
      %p137 = scmp.eq.s32.totalorder %s13, 0
      %p138 = por %p136, %p137
      %p139 = scmp.ne.s32.totalorder %s131, %s133
      %p140 = scmp.eq.s32.totalorder %s18, 1
      %p141 = por %p139, %p140
      %p142 = scmp.ne.s32.totalorder %s133, %s134
      %p143 = scmp.eq.s32.totalorder %s18, 0
      %p144 = por %p142, %p143
      %p145 = scmp.ne.s32.totalorder %s133, %s134
      %p146 = scmp.eq.s32.totalorder %s19, 1
      %p147 = por %p145, %p146
      %p149 = scmp.ne.s32.totalorder %s134, %s148
      %p150 = scmp.eq.s32.totalorder %s19, 0
      %p151 = por %p149, %p150
      %s152 = ssub.s32 %s13, %s20
      %p153 = scmp.eq.s32.totalorder %s152, 0
      %s155 = sadd.s32 %s154, 1
      %s156 = scalar_select %p153, %s154, %s155
      %p159 = pneg %p153
      %p160 = scmp.eq.s32.totalorder %s13, 1
      %p161 = por %p159, %p160
      %p162 = scmp.ne.s32.totalorder %s154, %s157
      %p163 = scmp.eq.s32.totalorder %s13, 0
      %p164 = por %p162, %p163
      %p165 = scmp.ne.s32.totalorder %s154, %s157
      %p166 = scmp.eq.s32.totalorder %s18, 1
      %p167 = por %p165, %p166
      %p168 = scmp.ne.s32.totalorder %s157, %s158
      %p169 = scmp.eq.s32.totalorder %s18, 0
      %p170 = por %p168, %p169
      %p171 = scmp.ne.s32.totalorder %s157, %s158
      %p172 = scmp.eq.s32.totalorder %s19, 1
      %p173 = por %p171, %p172
      %p175 = scmp.ne.s32.totalorder %s158, %s174
      %p176 = scmp.eq.s32.totalorder %s19, 0
      %p177 = por %p175, %p176
      %p178 = scmp.le.s32.totalorder 1, %s13
      %p179 = scmp.lt.s32.totalorder %s13, 3
      %p180 = pnand %p178, %p179
      %p181 = pneg %p180
      // Predicated region
      $region9: #{tpu_custom_call.1} parent=5 // pred_check
        _
      $region10: #{tpu_custom_call.1} parent=5 // pred_check_branch
        %183 = sbr.rel (%p180) target = $region12
      $region11: #{tpu_custom_call.1} parent=5 // pred_region
        %s184 = ssub.s32 %s13, 1
        // Predicated region
        $region13: #{tpu_custom_call.1} parent=11 // pred_check
          %p185 = pneg %p60
        $region14: #{tpu_custom_call.1} parent=11 // pred_check_branch
          %187 = sbr.rel (%p185) target = $region16
        $region15: #{tpu_custom_call.1} parent=11 // pred_region
          _
        $region16: #{tpu_custom_call.1} parent=11 // pred_fallthru
          _
        // Predicated region
        $region17: #{tpu_custom_call.1} parent=11 // pred_check
          %p188 = pneg %p81
        $region18: #{tpu_custom_call.1} parent=11 // pred_check_branch
          %190 = sbr.rel (%p188) target = $region20
        $region19: #{tpu_custom_call.1} parent=11 // pred_region
          %s192 = ssub.s32 2048, 2048
          %193 = vsyncadd [#allocation3], %s192
          %s194 = sshll.u32 [#allocation2], 4
          %s195 = int_to_ptr.vmem [resolvable:$true] %s194
          %200 = dma.hbm_to_vmem [thread:$0]  %s2, 2048, %s195, [#allocation3], 128, 128, 8
        $region20: #{tpu_custom_call.1} parent=11 // pred_fallthru
          _
        // Predicated region
        $region21: #{tpu_custom_call.1} parent=11 // pred_check
          %p201 = pneg %p102
        $region22: #{tpu_custom_call.1} parent=11 // pred_check_branch
          %203 = sbr.rel (%p201) target = $region24
        $region23: #{tpu_custom_call.1} parent=11 // pred_region
          _
        $region24: #{tpu_custom_call.1} parent=11 // pred_fallthru
          _
        // Predicated region
        $region25: #{tpu_custom_call.1} parent=11 // pred_check
          %p204 = pneg %p123
        $region26: #{tpu_custom_call.1} parent=11 // pred_check_branch
          %206 = sbr.rel (%p204) target = $region28
        $region27: #{tpu_custom_call.1} parent=11 // pred_region
          _
        $region28: #{tpu_custom_call.1} parent=11 // pred_fallthru
          _
        // Predicated region
        $region29: #{tpu_custom_call.1} parent=11 // pred_check
          %p207 = pneg %p144
        $region30: #{tpu_custom_call.1} parent=11 // pred_check_branch
          %209 = sbr.rel (%p207) target = $region32
        $region31: #{tpu_custom_call.1} parent=11 // pred_region
          _
        $region32: #{tpu_custom_call.1} parent=11 // pred_fallthru
          _
      $region12: #{tpu_custom_call.1} parent=5 // pred_fallthru
        _
      %p210 = scmp.lt.s32.totalorder %s13, 2
      // Predicated region
      $region33: #{tpu_custom_call.1} parent=5 // pred_check
        %p211 = pneg %p210
      $region34: #{tpu_custom_call.1} parent=5 // pred_check_branch
        %213 = sbr.rel (%p211) target = $region36
      $region35: #{tpu_custom_call.1} parent=5 // pred_region
        // Predicated region
        $region37: #{tpu_custom_call.1} parent=35 // pred_check
          %p214 = pneg %p33
        $region38: #{tpu_custom_call.1} parent=35 // pred_check_branch
          %216 = sbr.rel (%p214) target = $region40
        $region39: #{tpu_custom_call.1} parent=35 // pred_region
          %p217 = scmp.lt.s32.totalorder %s13, 1
          %s218 = scalar_select %p217, %s13, 1
          %s219 = smul.addr %s218, 8
          %s220 = scalar_lea.vmem %s0, %s219
        $region40: #{tpu_custom_call.1} parent=35 // pred_fallthru
          _
      $region36: #{tpu_custom_call.1} parent=5 // pred_fallthru
        _
      %p221 = scmp.le.s32.totalorder 1, %s13
      %p222 = scmp.lt.s32.totalorder %s13, 3
      %p223 = pnand %p221, %p222
      %p224 = pneg %p223
      // Predicated region
      $region41: #{tpu_custom_call.1} parent=5 // pred_check
        _
      $region42: #{tpu_custom_call.1} parent=5 // pred_check_branch
        %226 = sbr.rel (%p223) target = $region44
      $region43: #{tpu_custom_call.1} parent=5 // pred_region
        %s227 = ssub.s32 %s13, 1
        // Predicated region
        $region45: #{tpu_custom_call.1} parent=43 // pred_check
          %p228 = pneg %p81
        $region46: #{tpu_custom_call.1} parent=43 // pred_check_branch
          %230 = sbr.rel (%p228) target = $region48
        $region47: #{tpu_custom_call.1} parent=43 // pred_region
          %231 = dma.done [#allocation3], 2048
        $region48: #{tpu_custom_call.1} parent=43 // pred_fallthru
          _
        %p232 = scmp.lt.s32.totalorder %s18, 1
        %s233 = scalar_select %p232, %s18, 1
        %s234 = smul.addr %s233, 8
        %s235 = scalar_lea.vmem %s0, %s234
        %p236 = pneg %p39
        %p237 = pneg %p36
        %p238 = pneg %p60
        %p239 = pneg %p57
        %p240 = pneg %p81
        %p241 = pneg %p78
        %p242 = pneg %p102
        %p243 = pneg %p99
        %p244 = pneg %p123
        %p245 = pneg %p120
        %p246 = pneg %p144
        %p247 = pneg %p141
        %p248 = pneg %p170
        %p249 = pneg %p167
        %p250 = scmp.lt.s32.totalorder %s18, 1
        %s251 = scalar_select %p250, %s18, 1
        %s252 = smul.addr %s251, 8
        %s253 = scalar_lea.vmem %s6, %s252
        %p254 = scmp.lt.s32.totalorder %s18, 1
        %s255 = scalar_select %p254, %s18, 1
        %s256 = smul.addr %s255, 8
        %s257 = scalar_lea.vmem %s0, %s256
        %p258 = scmp.lt.s32.totalorder %s18, 1
        %s259 = scalar_select %p258, %s18, 1
        %s260 = smul.addr %s259, 8
        %s261 = scalar_lea.vmem %s6, %s260
        %v262 = vld [vmem:[%s257] sm:$0xff]
        %v263 = vld [vmem:[%s1] sm:$0xff]
        %v264 = vld [vmem:[%s1 + $0x8] sm:$0xff]
        %v265 = vld [vmem:[%s1 + $0x10] sm:$0xff]
        %v266 = vld [vmem:[%s1 + $0x18] sm:$0xff]
        %vm267 = vcmask 261120
        %v269 = vsel %vm267, %v262, 0
        %271 = vmatprep.subr.mxu0 0.0
        %272 = vmatpush1.msra.mxu0 %v263
        %273 = vmatprep.subr.mxu0 0.0
        %274 = vmatpush1.msra.mxu0 %v264
        %275 = vmatprep.subr.mxu0 0.0
        %276 = vmatpush1.msra.mxu0 %v265
        %277 = vmatprep.subr.mxu0 0.0
        %278 = vmatpush1.msra.mxu0 %v266
        %279 = vmatprep.subr.mxu0 0.0
        %280 = vmatpush1.msra.mxu0 0.0
        %281 = vmatprep.subr.mxu0 0.0
        %282 = vmatpush1.msra.mxu0 0.0
        %283 = vmatprep.subr.mxu0 0.0
        %284 = vmatpush1.msra.mxu0 0.0
        %285 = vmatprep.subr.mxu0 0.0
        %286 = vmatpush1.msra.mxu0 0.0
        %287 = vmatprep.subr.mxu0 0.0
        %288 = vmatpush1.msra.mxu0 0.0
        %289 = vmatprep.subr.mxu0 0.0
        %290 = vmatpush1.msra.mxu0 0.0
        %291 = vmatprep.subr.mxu0 0.0
        %292 = vmatpush1.msra.mxu0 0.0
        %293 = vmatprep.subr.mxu0 0.0
        %294 = vmatpush1.msra.mxu0 0.0
        %295 = vmatprep.subr.mxu0 0.0
        %296 = vmatpush1.msra.mxu0 0.0
        %297 = vmatprep.subr.mxu0 0.0
        %298 = vmatpush1.msra.mxu0 0.0
        %299 = vmatprep.subr.mxu0 0.0
        %300 = vmatpush1.msra.mxu0 0.0
        %301 = vmatprep.subr.mxu0 0.0
        %302 = vmatpush1.msra.mxu0 0.0
        %303 = vmatprep.subr.mxu0 0.0
        %304 = vmatpush1.msra.mxu0 0.0
        %305 = vmatprep.subr.mxu0 0.0
        %306 = vmatpush1.msra.mxu0 0.0
        %307 = vmatprep.subr.mxu0 0.0
        %308 = vmatpush1.msra.mxu0 0.0
        %309 = vmatprep.subr.mxu0 0.0
        %310 = vmatpush1.msra.mxu0 0.0
        %311 = vmatprep.subr.mxu0 0.0
        %312 = vmatpush1.msra.mxu0 0.0
        %313 = vmatprep.subr.mxu0 0.0
        %314 = vmatpush1.msra.mxu0 0.0
        %315 = vmatprep.subr.mxu0 0.0
        %316 = vmatpush1.msra.mxu0 0.0
        %317 = vmatprep.subr.mxu0 0.0
        %318 = vmatpush1.msra.mxu0 0.0
        %319 = vmatprep.subr.mxu0 0.0
        %320 = vmatpush1.msra.mxu0 0.0
        %321 = vmatprep.subr.mxu0 0.0
        %322 = vmatpush1.msra.mxu0 0.0
        %323 = vmatprep.subr.mxu0 0.0
        %324 = vmatpush1.msra.mxu0 0.0
        %325 = vmatprep.subr.mxu0 0.0
        %326 = vmatpush1.msra.mxu0 0.0
        %327 = vmatprep.subr.mxu0 0.0
        %328 = vmatpush1.msra.mxu0 0.0
        %329 = vmatprep.subr.mxu0 0.0
        %330 = vmatpush1.msra.mxu0 0.0
        %331 = vmatprep.subr.mxu0 0.0
        %332 = vmatpush1.msra.mxu0 0.0
        %333 = vmatprep.subr.mxu0 0.0
        %334 = vmatpush1.msra.mxu0 0.0
        %335 = vmatprep.mubr.f32.mxu0 0.0
        %336 = vmatmul.mubr.f32.gmra.mrb[0].mxu0 %v269
        %v337 = vpop.f32.mrb[0].mxu0
        %v338 = vadd.f32 0.0, %v337
        %v339 = vpop.f32.mrb[0].mxu0
        %340 = vdwg.mxu0
        %v341 = vmax.f32 %v338, 0.0
        %v342 = vld [vmem:[#allocation2] sm:$0xff]
        %v343 = vld [vmem:[#allocation2 + $0x8] sm:$0xff]
        %v344 = vld [vmem:[#allocation2 + $0x10] sm:$0xff]
        %v345 = vld [vmem:[#allocation2 + $0x18] sm:$0xff]
        %v346 = vld [vmem:[#allocation2 + $0x20] sm:$0xff]
        %v347 = vld [vmem:[#allocation2 + $0x28] sm:$0xff]
        %v348 = vld [vmem:[#allocation2 + $0x30] sm:$0xff]
        %v349 = vld [vmem:[#allocation2 + $0x38] sm:$0xff]
        %v350 = vld [vmem:[%s3] sm:$0x1]
        %v352 = vlaneseq
        %v353 = vshrl.u32 %v352, 7
        %v354 = vsub.s32 0, %v353
        %v355 = vrot.slane %v350, %v354
        %vm357 = vcmask 523264
        %v359 = vsel %vm357, %v341, 0
        %361 = vmatprep.subr.mxu0 0.0
        %362 = vmatpush1.msra.mxu0 %v342
        %363 = vmatprep.subr.mxu0 0.0
        %364 = vmatpush1.msra.mxu0 %v343
        %365 = vmatprep.subr.mxu0 0.0
        %366 = vmatpush1.msra.mxu0 %v344
        %367 = vmatprep.subr.mxu0 0.0
        %368 = vmatpush1.msra.mxu0 %v345
        %369 = vmatprep.subr.mxu0 0.0
        %370 = vmatpush1.msra.mxu0 %v346
        %371 = vmatprep.subr.mxu0 0.0
        %372 = vmatpush1.msra.mxu0 %v347
        %373 = vmatprep.subr.mxu0 0.0
        %374 = vmatpush1.msra.mxu0 %v348
        %375 = vmatprep.subr.mxu0 0.0
        %376 = vmatpush1.msra.mxu0 %v349
        %377 = vmatprep.subr.mxu0 0.0
        %378 = vmatpush1.msra.mxu0 0.0
        %379 = vmatprep.subr.mxu0 0.0
        %380 = vmatpush1.msra.mxu0 0.0
        %381 = vmatprep.subr.mxu0 0.0
        %382 = vmatpush1.msra.mxu0 0.0
        %383 = vmatprep.subr.mxu0 0.0
        %384 = vmatpush1.msra.mxu0 0.0
        %385 = vmatprep.subr.mxu0 0.0
        %386 = vmatpush1.msra.mxu0 0.0
        %387 = vmatprep.subr.mxu0 0.0
        %388 = vmatpush1.msra.mxu0 0.0
        %389 = vmatprep.subr.mxu0 0.0
        %390 = vmatpush1.msra.mxu0 0.0
        %391 = vmatprep.subr.mxu0 0.0
        %392 = vmatpush1.msra.mxu0 0.0
        %393 = vmatprep.subr.mxu0 0.0
        %394 = vmatpush1.msra.mxu0 0.0
        %395 = vmatprep.subr.mxu0 0.0
        %396 = vmatpush1.msra.mxu0 0.0
        %397 = vmatprep.subr.mxu0 0.0
        %398 = vmatpush1.msra.mxu0 0.0
        %399 = vmatprep.subr.mxu0 0.0
        %400 = vmatpush1.msra.mxu0 0.0
        %401 = vmatprep.subr.mxu0 0.0
        %402 = vmatpush1.msra.mxu0 0.0
        %403 = vmatprep.subr.mxu0 0.0
        %404 = vmatpush1.msra.mxu0 0.0
        %405 = vmatprep.subr.mxu0 0.0
        %406 = vmatpush1.msra.mxu0 0.0
        %407 = vmatprep.subr.mxu0 0.0
        %408 = vmatpush1.msra.mxu0 0.0
        %409 = vmatprep.subr.mxu0 0.0
        %410 = vmatpush1.msra.mxu0 0.0
        %411 = vmatprep.subr.mxu0 0.0
        %412 = vmatpush1.msra.mxu0 0.0
        %413 = vmatprep.subr.mxu0 0.0
        %414 = vmatpush1.msra.mxu0 0.0
        %415 = vmatprep.subr.mxu0 0.0
        %416 = vmatpush1.msra.mxu0 0.0
        %417 = vmatprep.subr.mxu0 0.0
        %418 = vmatpush1.msra.mxu0 0.0
        %419 = vmatprep.subr.mxu0 0.0
        %420 = vmatpush1.msra.mxu0 0.0
        %421 = vmatprep.subr.mxu0 0.0
        %422 = vmatpush1.msra.mxu0 0.0
        %423 = vmatprep.subr.mxu0 0.0
        %424 = vmatpush1.msra.mxu0 0.0
        %425 = vmatprep.mubr.f32.mxu0 0.0
        %426 = vmatmul.mubr.f32.gmra.mrb[0].mxu0 %v359
        %v427 = vpop.f32.mrb[0].mxu0
        %v428 = vadd.f32 %v355, %v427
        %v429 = vpop.f32.mrb[0].mxu0
        %430 = vdwg.mxu0
        %v431 = vmax.f32 %v428, 0.0
        %s432 = scalar_lea.vmem [#allocation2], 64
        %v433 = vld [vmem:[%s432] sm:$0xff]
        %v434 = vld [vmem:[%s432 + $0x8] sm:$0xff]
        %v435 = vld [vmem:[%s432 + $0x10] sm:$0xff]
        %v436 = vld [vmem:[%s432 + $0x18] sm:$0xff]
        %v437 = vld [vmem:[%s432 + $0x20] sm:$0xff]
        %v438 = vld [vmem:[%s432 + $0x28] sm:$0xff]
        %v439 = vld [vmem:[%s432 + $0x30] sm:$0xff]
        %v440 = vld [vmem:[%s432 + $0x38] sm:$0xff]
        %s441 = scalar_lea.vmem %s3, 1
        %v442 = vld [vmem:[%s441] sm:$0x1]
        %v444 = vlaneseq
        %v445 = vshrl.u32 %v444, 7
        %v446 = vsub.s32 0, %v445
        %v447 = vrot.slane %v442, %v446
        %v450 = vsel %vm357, %v431, 0
        %452 = vmatprep.subr.mxu0 0.0
        %453 = vmatpush1.msra.mxu0 %v433
        %454 = vmatprep.subr.mxu0 0.0
        %455 = vmatpush1.msra.mxu0 %v434
        %456 = vmatprep.subr.mxu0 0.0
        %457 = vmatpush1.msra.mxu0 %v435
        %458 = vmatprep.subr.mxu0 0.0
        %459 = vmatpush1.msra.mxu0 %v436
        %460 = vmatprep.subr.mxu0 0.0
        %461 = vmatpush1.msra.mxu0 %v437
        %462 = vmatprep.subr.mxu0 0.0
        %463 = vmatpush1.msra.mxu0 %v438
        %464 = vmatprep.subr.mxu0 0.0
        %465 = vmatpush1.msra.mxu0 %v439
        %466 = vmatprep.subr.mxu0 0.0
        %467 = vmatpush1.msra.mxu0 %v440
        %468 = vmatprep.subr.mxu0 0.0
        %469 = vmatpush1.msra.mxu0 0.0
        %470 = vmatprep.subr.mxu0 0.0
        %471 = vmatpush1.msra.mxu0 0.0
        %472 = vmatprep.subr.mxu0 0.0
        %473 = vmatpush1.msra.mxu0 0.0
        %474 = vmatprep.subr.mxu0 0.0
        %475 = vmatpush1.msra.mxu0 0.0
        %476 = vmatprep.subr.mxu0 0.0
        %477 = vmatpush1.msra.mxu0 0.0
        %478 = vmatprep.subr.mxu0 0.0
        %479 = vmatpush1.msra.mxu0 0.0
        %480 = vmatprep.subr.mxu0 0.0
        %481 = vmatpush1.msra.mxu0 0.0
        %482 = vmatprep.subr.mxu0 0.0
        %483 = vmatpush1.msra.mxu0 0.0
        %484 = vmatprep.subr.mxu0 0.0
        %485 = vmatpush1.msra.mxu0 0.0
        %486 = vmatprep.subr.mxu0 0.0
        %487 = vmatpush1.msra.mxu0 0.0
        %488 = vmatprep.subr.mxu0 0.0
        %489 = vmatpush1.msra.mxu0 0.0
        %490 = vmatprep.subr.mxu0 0.0
        %491 = vmatpush1.msra.mxu0 0.0
        %492 = vmatprep.subr.mxu0 0.0
        %493 = vmatpush1.msra.mxu0 0.0
        %494 = vmatprep.subr.mxu0 0.0
        %495 = vmatpush1.msra.mxu0 0.0
        %496 = vmatprep.subr.mxu0 0.0
        %497 = vmatpush1.msra.mxu0 0.0
        %498 = vmatprep.subr.mxu0 0.0
        %499 = vmatpush1.msra.mxu0 0.0
        %500 = vmatprep.subr.mxu0 0.0
        %501 = vmatpush1.msra.mxu0 0.0
        %502 = vmatprep.subr.mxu0 0.0
        %503 = vmatpush1.msra.mxu0 0.0
        %504 = vmatprep.subr.mxu0 0.0
        %505 = vmatpush1.msra.mxu0 0.0
        %506 = vmatprep.subr.mxu0 0.0
        %507 = vmatpush1.msra.mxu0 0.0
        %508 = vmatprep.subr.mxu0 0.0
        %509 = vmatpush1.msra.mxu0 0.0
        %510 = vmatprep.subr.mxu0 0.0
        %511 = vmatpush1.msra.mxu0 0.0
        %512 = vmatprep.subr.mxu0 0.0
        %513 = vmatpush1.msra.mxu0 0.0
        %514 = vmatprep.subr.mxu0 0.0
        %515 = vmatpush1.msra.mxu0 0.0
        %516 = vmatprep.mubr.f32.mxu0 0.0
        %517 = vmatmul.mubr.f32.gmra.mrb[0].mxu0 %v450
        %v518 = vpop.f32.mrb[0].mxu0
        %v519 = vadd.f32 %v447, %v518
        %v520 = vpop.f32.mrb[0].mxu0
        %521 = vdwg.mxu0
        %v522 = vmax.f32 %v519, 0.0
        %v523 = vld [vmem:[%s4] sm:$0xff]
        %v524 = vld [vmem:[%s4 + $0x8] sm:$0xff]
        %v525 = vld [vmem:[%s4 + $0x10] sm:$0xff]
        %v526 = vld [vmem:[%s4 + $0x18] sm:$0xff]
        %v527 = vld [vmem:[%s4 + $0x20] sm:$0xff]
        %v528 = vld [vmem:[%s4 + $0x28] sm:$0xff]
        %v529 = vld [vmem:[%s4 + $0x30] sm:$0xff]
        %v530 = vld [vmem:[%s4 + $0x38] sm:$0xff]
        %v531 = vld [vmem:[%s5] sm:$0x1]
        %v533 = vlaneseq
        %v534 = vshrl.u32 %v533, 7
        %v535 = vsub.s32 0, %v534
        %v536 = vrot.slane %v531, %v535
        %v539 = vsel %vm357, %v522, 0
        %541 = vmatprep.subr.mxu0 0.0
        %542 = vmatpush1.msra.mxu0 %v523
        %543 = vmatprep.subr.mxu0 0.0
        %544 = vmatpush1.msra.mxu0 %v524
        %545 = vmatprep.subr.mxu0 0.0
        %546 = vmatpush1.msra.mxu0 %v525
        %547 = vmatprep.subr.mxu0 0.0
        %548 = vmatpush1.msra.mxu0 %v526
        %549 = vmatprep.subr.mxu0 0.0
        %550 = vmatpush1.msra.mxu0 %v527
        %551 = vmatprep.subr.mxu0 0.0
        %552 = vmatpush1.msra.mxu0 %v528
        %553 = vmatprep.subr.mxu0 0.0
        %554 = vmatpush1.msra.mxu0 %v529
        %555 = vmatprep.subr.mxu0 0.0
        %556 = vmatpush1.msra.mxu0 %v530
        %557 = vmatprep.subr.mxu0 0.0
        %558 = vmatpush1.msra.mxu0 0.0
        %559 = vmatprep.subr.mxu0 0.0
        %560 = vmatpush1.msra.mxu0 0.0
        %561 = vmatprep.subr.mxu0 0.0
        %562 = vmatpush1.msra.mxu0 0.0
        %563 = vmatprep.subr.mxu0 0.0
        %564 = vmatpush1.msra.mxu0 0.0
        %565 = vmatprep.subr.mxu0 0.0
        %566 = vmatpush1.msra.mxu0 0.0
        %567 = vmatprep.subr.mxu0 0.0
        %568 = vmatpush1.msra.mxu0 0.0
        %569 = vmatprep.subr.mxu0 0.0
        %570 = vmatpush1.msra.mxu0 0.0
        %571 = vmatprep.subr.mxu0 0.0
        %572 = vmatpush1.msra.mxu0 0.0
        %573 = vmatprep.subr.mxu0 0.0
        %574 = vmatpush1.msra.mxu0 0.0
        %575 = vmatprep.subr.mxu0 0.0
        %576 = vmatpush1.msra.mxu0 0.0
        %577 = vmatprep.subr.mxu0 0.0
        %578 = vmatpush1.msra.mxu0 0.0
        %579 = vmatprep.subr.mxu0 0.0
        %580 = vmatpush1.msra.mxu0 0.0
        %581 = vmatprep.subr.mxu0 0.0
        %582 = vmatpush1.msra.mxu0 0.0
        %583 = vmatprep.subr.mxu0 0.0
        %584 = vmatpush1.msra.mxu0 0.0
        %585 = vmatprep.subr.mxu0 0.0
        %586 = vmatpush1.msra.mxu0 0.0
        %587 = vmatprep.subr.mxu0 0.0
        %588 = vmatpush1.msra.mxu0 0.0
        %589 = vmatprep.subr.mxu0 0.0
        %590 = vmatpush1.msra.mxu0 0.0
        %591 = vmatprep.subr.mxu0 0.0
        %592 = vmatpush1.msra.mxu0 0.0
        %593 = vmatprep.subr.mxu0 0.0
        %594 = vmatpush1.msra.mxu0 0.0
        %595 = vmatprep.subr.mxu0 0.0
        %596 = vmatpush1.msra.mxu0 0.0
        %597 = vmatprep.subr.mxu0 0.0
        %598 = vmatpush1.msra.mxu0 0.0
        %599 = vmatprep.subr.mxu0 0.0
        %600 = vmatpush1.msra.mxu0 0.0
        %601 = vmatprep.subr.mxu0 0.0
        %602 = vmatpush1.msra.mxu0 0.0
        %603 = vmatprep.subr.mxu0 0.0
        %604 = vmatpush1.msra.mxu0 0.0
        %605 = vmatprep.mubr.f32.mxu0 0.0
        %606 = vmatmul.mubr.f32.gmra.mrb[0].mxu0 %v539
        %v607 = vpop.f32.mrb[0].mxu0
        %v608 = vadd.f32 %v536, %v607
        %v609 = vpop.f32.mrb[0].mxu0
        %610 = vdwg.mxu0
        %vm611 = vcmask 64512
        %612 = vst.msk [vmem:[%s261] sm:$0xff] %vm611, %v608
        %p613 = scmp.lt.s32.totalorder %s18, 1
        %s614 = scalar_select %p613, %s18, 1
        %s615 = smul.addr %s614, 8
        %s616 = scalar_lea.vmem %s6, %s615
        // Predicated region
        $region49: #{tpu_custom_call.1} parent=43 // pred_check
          %p617 = pneg %p167
        $region50: #{tpu_custom_call.1} parent=43 // pred_check_branch
          %619 = sbr.rel (%p617) target = $region52
        $region51: #{tpu_custom_call.1} parent=43 // pred_region
          _
        $region52: #{tpu_custom_call.1} parent=43 // pred_fallthru
          _
      $region44: #{tpu_custom_call.1} parent=5 // pred_fallthru
        _
      %p620 = scmp.le.s32.totalorder 2, %s13
      // Predicated region
      $region53: #{tpu_custom_call.1} parent=5 // pred_check
        %p621 = pneg %p620
      $region54: #{tpu_custom_call.1} parent=5 // pred_check_branch
        %623 = sbr.rel (%p621) target = $region56
      $region55: #{tpu_custom_call.1} parent=5 // pred_region
        %s624 = ssub.s32 %s13, 2
        // Predicated region
        $region57: #{tpu_custom_call.1} parent=55 // pred_check
          %p625 = pneg %p173
        $region58: #{tpu_custom_call.1} parent=55 // pred_check_branch
          %627 = sbr.rel (%p625) target = $region60
        $region59: #{tpu_custom_call.1} parent=55 // pred_region
          %p628 = scmp.lt.s32.totalorder %s19, 1
          %s629 = scalar_select %p628, %s19, 1
          %s630 = smul.addr %s629, 8
          %s631 = scalar_lea.vmem %s6, %s630
        $region60: #{tpu_custom_call.1} parent=55 // pred_fallthru
          _
      $region56: #{tpu_custom_call.1} parent=5 // pred_fallthru
        _
    $region6: #{tpu_custom_call.1} parent=1 // loop_footer
      %s17 = sadd.s32 1, %s13
    $region7: #{tpu_custom_call.1} parent=1 // loop_footer_branch
      %12 = sbr.rel target = $region3
    $region8: #{tpu_custom_call.1} parent=1 // loop_exit
      _
    %632 = vsyncpa [#allocation3], 1
    %s633 = scalar_lea.sflag [#allocation3], 1
    %634 = vsyncpa %s633, 1

</llo_original>
